<compile_context>
chip_gen: v6e
topology: v6e:2x2x1
jax: 0.10.0
libtpu: 0.0.40
codegen_flags: <defaults>
</compile_context>

<pallas_src>
import jax
import jax.numpy as jnp
from jax.experimental import pallas as pl
from jax.experimental.pallas import tpu as pltpu

N_HEADS = 10


def _round_up(x, m):
    return ((x + m - 1) // m) * m


# ---------------------------------------------------------------------------
# Kernels
# ---------------------------------------------------------------------------
def _q_base(sa_ref, w1_ref, b1_ref, w2_ref, b2_ref, whc_ref, bhc_ref):
    """q = relu(relu(sa@W1+b1)@W2+b2) @ Wh_cat + bh_cat   (f32 accumulation).

    One MXU push per layer; the 10 head GEMMs are fused into a single
    lane-dense matmul against Wh_cat (F, 10*n_output).
    """
    f1 = jnp.dot(sa_ref[...], w1_ref[...], preferred_element_type=jnp.float32)
    f1 = jnp.maximum(f1 + b1_ref[...], 0.0)
    f2 = jnp.dot(f1.astype(w2_ref.dtype), w2_ref[...],
                 preferred_element_type=jnp.float32)
    f2 = jnp.maximum(f2 + b2_ref[...], 0.0)
    q = jnp.dot(f2.astype(whc_ref.dtype), whc_ref[...],
                preferred_element_type=jnp.float32)
    return q + bhc_ref[...]


def _critic_eval_kernel(sa_ref, w1_ref, b1_ref, w2_ref, b2_ref, whc_ref,
                        bhc_ref, out_ref):
    out_ref[...] = _q_base(sa_ref, w1_ref, b1_ref, w2_ref, b2_ref, whc_ref,
                           bhc_ref).astype(out_ref.dtype)


def _critic_train_kernel(sa_ref, w1_ref, b1_ref, w2_ref, b2_ref, whc_ref,
                         bhc_ref, noiseq_ref, out_ref):
    # Per-head feature noise enters exactly via linearity:
    #   (f2 + 0.01*n_h) @ Wh_h + bh_h = (f2 @ Wh_h + bh_h) + 0.01*(n_h @ Wh_h)
    # noiseq_ref already holds 0.01 * n_h @ Wh_h (per head, lane-packed), so
    # the kernel adds a single (tile_b, 10*n_output) term — no in-kernel PRNG,
    # no per-head matmuls.
    q = _q_base(sa_ref, w1_ref, b1_ref, w2_ref, b2_ref, whc_ref, bhc_ref)
    out_ref[...] = (q + noiseq_ref[...]).astype(out_ref.dtype)


# ---------------------------------------------------------------------------
# Wrapper
# ---------------------------------------------------------------------------
def multihead_critic_forward(state, action, params, *, training=False,
                             noise_seed=0, compute_dtype=jnp.float32,
                             tile_b=None):
    """Runs the Pallas kernel. `params` holds (in, out)-layout weights."""
    state = jnp.asarray(state, jnp.float32)
    action = jnp.asarray(action, jnp.float32)
    B = state.shape[0]
    sa = jnp.concatenate([state, action], axis=1)            # (B, n_input)
    n_input = sa.shape[1]

    w1, b1 = params["w1"], params["b1"]                      # (n_in, F), (1, F)
    w2, b2 = params["w2"], params["b2"]                      # (F, F),    (1, F)
    wh, bh = params["wh"], params["bh"]                      # (H, F, O), (H, 1, O)
    F_ = w1.shape[1]
    n_output = wh.shape[-1]
    HO = N_HEADS * n_output

    # One-time weight re-layouts (tiny; could be folded into init):
    #   * pack heads lane-contiguously: Wh_cat[:, h*O:(h+1)*O] = Wh_h
    cd = compute_dtype
    sa_c = sa.astype(cd)
    w1c = w1.astype(cd)
    w2c = w2.astype(cd)
    whc = jnp.transpose(wh, (1, 0, 2)).reshape(F_, HO).astype(cd)
    b1f = b1.astype(jnp.float32)
    b2f = b2.astype(jnp.float32)
    bhc = bh.reshape(1, HO).astype(jnp.float32)

    # ----- batch tiling ------------------------------------------------
    # Big tiles to amortize per-step pipeline overhead, but at least 2 grid
    # steps when B >= 16 so the "parallel" axis can use both v7x TensorCores.
    if tile_b is None:
        tile_b = min(512, _round_up(B, 8))
        if B >= 16:
            tile_b = min(tile_b, _round_up((B + 1) // 2, 8))
    b_pad = _round_up(B, tile_b)
    if b_pad != B:
        sa_c = jnp.pad(sa_c, ((0, b_pad - B), (0, 0)))
    grid = (b_pad // tile_b,)

    row_map = lambda i: (i, 0)     # batch-tiled operands / output
    fix_map = lambda i: (0, 0)     # VMEM-resident weights (same block each step)

    in_specs = [
        pl.BlockSpec((tile_b, n_input), row_map),
        pl.BlockSpec((n_input, F_), fix_map),
        pl.BlockSpec((1, F_), fix_map),
        pl.BlockSpec((F_, F_), fix_map),
        pl.BlockSpec((1, F_), fix_map),
        pl.BlockSpec((F_, HO), fix_map),
        pl.BlockSpec((1, HO), fix_map),
    ]
    operands = [sa_c, w1c, b1f, w2c, b2f, whc, bhc]

    if training:
        # N(0, 0.01^2) per-head feature noise (std = 0.01, matching
        # torch.randn_like(f2) * 0.01), pushed through the head weights in the
        # wrapper — exact by linearity of the head layers.
        key = jax.random.PRNGKey(noise_seed)
        n = jax.random.normal(key, (N_HEADS, B, F_), jnp.float32)
        noise_q = 0.01 * jnp.einsum(
            "hbf,hfo->bho", n, wh.astype(jnp.float32),
            precision=jax.lax.Precision.HIGHEST).reshape(B, HO)
        if b_pad != B:
            noise_q = jnp.pad(noise_q, ((0, b_pad - B), (0, 0)))
        in_specs.append(pl.BlockSpec((tile_b, HO), row_map))
        operands.append(noise_q)
        kernel = _critic_train_kernel
    else:
        kernel = _critic_eval_kernel

    grid_spec = pltpu.PrefetchScalarGridSpec(
        num_scalar_prefetch=0,
        grid=grid,
        in_specs=in_specs,
        out_specs=pl.BlockSpec((tile_b, HO), row_map),
    )

    q = pl.pallas_call(
        kernel,
        out_shape=jax.ShapeDtypeStruct((b_pad, HO), jnp.float32),
        grid_spec=grid_spec,
        compiler_params=pltpu.CompilerParams(
            dimension_semantics=("parallel",),      # shards across both v7x TCs
            vmem_limit_bytes=32 * 1024 * 1024,      # safe on v7x's 64 MiB VMEM
        ),
    )(*operands)

    q = q[:B]
    # Matches torch.squeeze(q): drops every size-1 dim (incl. batch if B == 1).
    return jnp.squeeze(q)


# ---------------------------------------------------------------------------
# Deterministic parameter init (mirrors the PyTorch __init__: xavier_uniform_
# with relu/linear gains, default nn.Linear bias init).
# ---------------------------------------------------------------------------
def _xavier_uniform(key, fan_in, fan_out, gain):
    bound = gain * jnp.sqrt(6.0 / (fan_in + fan_out))
    return jax.random.uniform(key, (fan_in, fan_out), jnp.float32,
                              minval=-bound, maxval=bound)


def _linear_bias(key, fan_in, n_out):
    bound = 1.0 / jnp.sqrt(fan_in)
    return jax.random.uniform(key, (1, n_out), jnp.float32,
                              minval=-bound, maxval=bound)


def init_params(key, n_input, n_features, n_output):
    gain_relu = jnp.sqrt(2.0)       # nn.init.calculate_gain('relu')
    gain_lin = 1.0                  # nn.init.calculate_gain('linear')
    keys = jax.random.split(key, 4 + 2 * N_HEADS)

    w1 = _xavier_uniform(keys[0], n_input, n_features, gain_relu)
    b1 = _linear_bias(keys[1], n_input, n_features)
    w2 = _xavier_uniform(keys[2], n_features, n_features, gain_relu)
    b2 = _linear_bias(keys[3], n_features, n_features)
    wh = jnp.stack([_xavier_uniform(keys[4 + 2 * h], n_features, n_output,
                                    gain_lin) for h in range(N_HEADS)])
    bh = jnp.stack([_linear_bias(keys[5 + 2 * h], n_features, n_output)
                    for h in range(N_HEADS)])
    return {"w1": w1, "b1": b1, "w2": w2, "b2": b2, "wh": wh, "bh": bh}


# Pure-JAX reference (high-precision matmuls so it is a valid oracle on TPU).
def _ref_forward(state, action, params, *, head_noise=None):
    hp = jax.lax.Precision.HIGHEST
    sa = jnp.concatenate([state.astype(jnp.float32),
                          action.astype(jnp.float32)], axis=1)
    f1 = jnp.maximum(jnp.dot(sa, params["w1"], precision=hp) + params["b1"], 0.0)
    f2 = jnp.maximum(jnp.dot(f1, params["w2"], precision=hp) + params["b2"], 0.0)
    qs = []
    for h in range(N_HEADS):
        f = f2 if head_noise is None else f2 + head_noise[h]
        qs.append(jnp.dot(f, params["wh"][h], precision=hp) + params["bh"][h])
    return jnp.squeeze(jnp.concatenate(qs, axis=-1))


# TODO(synk): heads_mask / update_heads_mask (Bernoulli head selection) is
# training-loop state that never enters forward(), so it is not implemented
# in the kernel.

if __name__ == "__main__":
    state_dim, action_dim = 6, 2      # n_input = 8
    n_features = 32
    n_output = 1                      # output_shape = (1,)

    key = jax.random.PRNGKey(0)
    k_params, k_state, k_action = jax.random.split(key, 3)
    params = init_params(k_params, state_dim + action_dim, n_features, n_output)

    # --- eval mode, B=8 (single batch tile) ---------------------------------
    B = 8
    state = jax.random.normal(k_state, (B, state_dim), jnp.float32)
    action = jax.random.normal(k_action, (B, action_dim), jnp.float32)
    q = jax.block_until_ready(
        multihead_critic_forward(state, action, params, training=False))
    q_ref = _ref_forward(state, action, params)
    assert q.shape == (B, N_HEADS * n_output)
    assert jnp.allclose(q, q_ref, atol=1e-4, rtol=1e-4)

    # --- eval mode, B=16: default tiling yields >= 2 parallel grid steps ----
    B2 = 16
    state2 = jax.random.normal(jax.random.PRNGKey(1), (B2, state_dim),
                               jnp.float32)
    action2 = jax.random.normal(jax.random.PRNGKey(2), (B2, action_dim),
                                jnp.float32)
    q2 = jax.block_until_ready(
        multihead_critic_forward(state2, action2, params, training=False))
    q2_ref = _ref_forward(state2, action2, params)
    assert jnp.allclose(q2, q2_ref, atol=1e-4, rtol=1e-4)

    # --- eval mode, ragged batch (B=5 padded to 8, sliced back) -------------
    q3 = jax.block_until_ready(
        multihead_critic_forward(state2[:5], action2[:5], params,
                                 training=False))
    assert q3.shape == (5, N_HEADS * n_output)
    assert jnp.allclose(q3, q2_ref[:5], atol=1e-4, rtol=1e-4)

    # --- training mode: exact check against per-feature-noise reference -----
    seed = 123
    q_tr = jax.block_until_ready(
        multihead_critic_forward(state, action, params, training=True,
                                 noise_seed=seed))
    noise = 0.01 * jax.random.normal(jax.random.PRNGKey(seed),
                                     (N_HEADS, B, n_features), jnp.float32)
    q_tr_ref = _ref_forward(state, action, params, head_noise=noise)
    assert q_tr.shape == (B, N_HEADS * n_output)
    assert jnp.allclose(q_tr, q_tr_ref, atol=1e-4, rtol=1e-4)

    # --- bf16 compute path (f32 accumulation) smoke test --------------------
    q_bf16 = jax.block_until_ready(
        multihead_critic_forward(state, action, params, training=False,
                                 compute_dtype=jnp.bfloat16))
    assert jnp.allclose(q_bf16, q_ref, atol=0.1, rtol=0.1)

    print("KERNEL_OK")
</pallas_src>

<mosaic_0001>
module attributes {stable_mosaic.version = 11 : i64} {
  func.func @_critic_eval_kernel(%arg0: i32, %arg1: memref<8x8xf32, #tpu.memory_space<vmem>>, %arg2: memref<8x32xf32, #tpu.memory_space<vmem>>, %arg3: memref<1x32xf32, #tpu.memory_space<vmem>>, %arg4: memref<32x32xf32, #tpu.memory_space<vmem>>, %arg5: memref<1x32xf32, #tpu.memory_space<vmem>>, %arg6: memref<32x10xf32, #tpu.memory_space<vmem>>, %arg7: memref<1x10xf32, #tpu.memory_space<vmem>>, %arg8: memref<8x10xf32, #tpu.memory_space<vmem>>) attributes {dimension_semantics = [#tpu.dimension_semantics<parallel>], iteration_bounds = array<i64: 1>, scalar_prefetch = 0 : i64, scratch_operands = 0 : i64, tpu.core_type = #tpu.core_type<tc>, window_params = [{transform_indices = @transform_0, window_bounds = array<i64: 8, 8>}, {pipeline_mode = #tpu.pipeline_mode<synchronous>, transform_indices = @transform_1, window_bounds = array<i64: 8, 32>}, {pipeline_mode = #tpu.pipeline_mode<synchronous>, transform_indices = @transform_2, window_bounds = array<i64: 1, 32>}, {pipeline_mode = #tpu.pipeline_mode<synchronous>, transform_indices = @transform_3, window_bounds = array<i64: 32, 32>}, {pipeline_mode = #tpu.pipeline_mode<synchronous>, transform_indices = @transform_4, window_bounds = array<i64: 1, 32>}, {pipeline_mode = #tpu.pipeline_mode<synchronous>, transform_indices = @transform_5, window_bounds = array<i64: 32, 10>}, {pipeline_mode = #tpu.pipeline_mode<synchronous>, transform_indices = @transform_6, window_bounds = array<i64: 1, 10>}, {transform_indices = @transform_7, window_bounds = array<i64: 8, 10>}]} {
    %c0 = arith.constant 0 : index
    %c0_0 = arith.constant 0 : index
    %0 = vector.load %arg1[%c0, %c0_0] : memref<8x8xf32, #tpu.memory_space<vmem>>, vector<8x8xf32>
    %c0_1 = arith.constant 0 : index
    %c0_2 = arith.constant 0 : index
    %1 = vector.load %arg2[%c0_1, %c0_2] : memref<8x32xf32, #tpu.memory_space<vmem>>, vector<8x32xf32>
    %cst = arith.constant dense<0.000000e+00> : vector<8x32xf32>
    %2 = tpu.matmul %0, %1, %cst {dimension_numbers = #tpu.dot_dimension_numbers<[1], [0], [0], [1], [0, 0, 1, 1], [], []>} : vector<8x8xf32>, vector<8x32xf32>, vector<8x32xf32> -> vector<8x32xf32>
    %c0_3 = arith.constant 0 : index
    %c0_4 = arith.constant 0 : index
    %3 = vector.load %arg3[%c0_3, %c0_4] : memref<1x32xf32, #tpu.memory_space<vmem>>, vector<1x32xf32>
    %4 = vector.broadcast %3 : vector<1x32xf32> to vector<8x32xf32>
    %5 = arith.addf %2, %4 : vector<8x32xf32>
    %cst_5 = arith.constant 0.000000e+00 : f32
    %6 = vector.broadcast %cst_5 : f32 to vector<8x32xf32>
    %7 = arith.maximumf %5, %6 : vector<8x32xf32>
    %c0_6 = arith.constant 0 : index
    %c0_7 = arith.constant 0 : index
    %8 = vector.load %arg4[%c0_6, %c0_7] : memref<32x32xf32, #tpu.memory_space<vmem>>, vector<32x32xf32>
    %cst_8 = arith.constant dense<0.000000e+00> : vector<8x32xf32>
    %9 = tpu.matmul %7, %8, %cst_8 {dimension_numbers = #tpu.dot_dimension_numbers<[1], [0], [0], [1], [0, 0, 1, 1], [], []>} : vector<8x32xf32>, vector<32x32xf32>, vector<8x32xf32> -> vector<8x32xf32>
    %c0_9 = arith.constant 0 : index
    %c0_10 = arith.constant 0 : index
    %10 = vector.load %arg5[%c0_9, %c0_10] : memref<1x32xf32, #tpu.memory_space<vmem>>, vector<1x32xf32>
    %11 = vector.broadcast %10 : vector<1x32xf32> to vector<8x32xf32>
    %12 = arith.addf %9, %11 : vector<8x32xf32>
    %cst_11 = arith.constant 0.000000e+00 : f32
    %13 = vector.broadcast %cst_11 : f32 to vector<8x32xf32>
    %14 = arith.maximumf %12, %13 : vector<8x32xf32>
    %c0_12 = arith.constant 0 : index
    %c0_13 = arith.constant 0 : index
    %15 = vector.load %arg6[%c0_12, %c0_13] : memref<32x10xf32, #tpu.memory_space<vmem>>, vector<32x10xf32>
    %cst_14 = arith.constant dense<0.000000e+00> : vector<8x10xf32>
    %16 = tpu.matmul %14, %15, %cst_14 {dimension_numbers = #tpu.dot_dimension_numbers<[1], [0], [0], [1], [0, 0, 1, 1], [], []>} : vector<8x32xf32>, vector<32x10xf32>, vector<8x10xf32> -> vector<8x10xf32>
    %c0_15 = arith.constant 0 : index
    %c0_16 = arith.constant 0 : index
    %17 = vector.load %arg7[%c0_15, %c0_16] : memref<1x10xf32, #tpu.memory_space<vmem>>, vector<1x10xf32>
    %18 = vector.broadcast %17 : vector<1x10xf32> to vector<8x10xf32>
    %19 = arith.addf %16, %18 : vector<8x10xf32>
    %c0_17 = arith.constant 0 : index
    %c0_18 = arith.constant 0 : index
    %20 = vector.load %arg8[%c0_17, %c0_18] : memref<8x10xf32, #tpu.memory_space<vmem>>, vector<8x10xf32>
    tpu.vector_store %arg8[%c0_17, %c0_18], %19 {strides = array<i32>} : memref<8x10xf32, #tpu.memory_space<vmem>>, vector<8x10xf32>,
    return
  }
  func.func @transform_0(%arg0: i32) -> (i32, i32) {
    %c0_i32 = arith.constant 0 : i32
    %c0_i32_0 = arith.constant 0 : i32
    return %arg0, %c0_i32 : i32, i32
  }
  func.func @transform_1(%arg0: i32) -> (i32, i32) {
    %c0_i32 = arith.constant 0 : i32
    %c0_i32_0 = arith.constant 0 : i32
    %c0_i32_1 = arith.constant 0 : i32
    return %c0_i32, %c0_i32_0 : i32, i32
  }
  func.func @transform_2(%arg0: i32) -> (i32, i32) {
    %c0_i32 = arith.constant 0 : i32
    %c0_i32_0 = arith.constant 0 : i32
    %c0_i32_1 = arith.constant 0 : i32
    return %c0_i32, %c0_i32_0 : i32, i32
  }
  func.func @transform_3(%arg0: i32) -> (i32, i32) {
    %c0_i32 = arith.constant 0 : i32
    %c0_i32_0 = arith.constant 0 : i32
    %c0_i32_1 = arith.constant 0 : i32
    return %c0_i32, %c0_i32_0 : i32, i32
  }
  func.func @transform_4(%arg0: i32) -> (i32, i32) {
    %c0_i32 = arith.constant 0 : i32
    %c0_i32_0 = arith.constant 0 : i32
    %c0_i32_1 = arith.constant 0 : i32
    return %c0_i32, %c0_i32_0 : i32, i32
  }
  func.func @transform_5(%arg0: i32) -> (i32, i32) {
    %c0_i32 = arith.constant 0 : i32
    %c0_i32_0 = arith.constant 0 : i32
    %c0_i32_1 = arith.constant 0 : i32
    return %c0_i32, %c0_i32_0 : i32, i32
  }
  func.func @transform_6(%arg0: i32) -> (i32, i32) {
    %c0_i32 = arith.constant 0 : i32
    %c0_i32_0 = arith.constant 0 : i32
    %c0_i32_1 = arith.constant 0 : i32
    return %c0_i32, %c0_i32_0 : i32, i32
  }
  func.func @transform_7(%arg0: i32) -> (i32, i32) {
    %c0_i32 = arith.constant 0 : i32
    %c0_i32_0 = arith.constant 0 : i32
    return %arg0, %c0_i32 : i32, i32
  }
}

</mosaic_0001>

<llo_original>
// kernel: tpu_custom_call.1
$region0: #{tpu_custom_call.1}
  #allocation0 [shape = 'u32[]', space=smem, size = 0x4, offset = 0x4, fixed_abs, tag = 'smem constant byte address 0x4 - core index']
  #allocation1 [shape = 'u32[144,128]{1,0:T(1,128)}', space=vmem, size = 0x12000, scoped, tag = 'internal scratch']
  %s0 = inlined_call_operand.vmem [shape: f32[8,8], index: 0, kind: input, shape index: {}]
  %s1 = inlined_call_operand.vmem [shape: f32[8,32], index: 1, kind: input, shape index: {}]
  %s2 = inlined_call_operand.vmem [shape: f32[1,32], index: 2, kind: input, shape index: {}]
  %s3 = inlined_call_operand.vmem [shape: f32[32,32], index: 3, kind: input, shape index: {}]
  %s4 = inlined_call_operand.vmem [shape: f32[1,32], index: 4, kind: input, shape index: {}]
  %s5 = inlined_call_operand.vmem [shape: f32[32,10], index: 5, kind: input, shape index: {}]
  %s6 = inlined_call_operand.vmem [shape: f32[1,10], index: 6, kind: input, shape index: {}]
  %s7 = inlined_call_operand.hbm [shape: f32[8,10], index: 7, kind: output, shape index: {}]
  %s8 = sld [smem:[#allocation0]]
  $region38: #{tpu_custom_call.1} parent=0
    _
  %s10 = ssub.s32 1, %s8
  %s11 = scalar_select 0, %s10, %s8
  $region1: #{tpu_custom_call.1} parent=0
    #allocation2 [shape = 'u8[4096]{0}', space=vmem, size = 0x1000, scoped, tag = 'output window, operand 0, single buffered']
    #allocation3 [shape = 's32[1]{0}', space=sflag, size = 0x4, scoped, tag = 'scoped memory for tpu_custom_call.1']
    %12 = vsyncpa [#allocation3], 0
    // Predicated region
    $region2: #{tpu_custom_call.1} parent=1 // pred_check
      _
    $region3: #{tpu_custom_call.1} parent=1 // pred_check_branch
      %14 = sbr.rel (0) target = $region5
    $region4: #{tpu_custom_call.1} parent=1 // pred_region
      _
    $region5: #{tpu_custom_call.1} parent=1 // pred_fallthru
      _
    // Predicated region
    $region6: #{tpu_custom_call.1} parent=1 // pred_check
      _
    $region7: #{tpu_custom_call.1} parent=1 // pred_check_branch
      %16 = sbr.rel (0) target = $region9
    $region8: #{tpu_custom_call.1} parent=1 // pred_region
      _
    $region9: #{tpu_custom_call.1} parent=1 // pred_fallthru
      _
    // Predicated region
    $region10: #{tpu_custom_call.1} parent=1 // pred_check
      _
    $region11: #{tpu_custom_call.1} parent=1 // pred_check_branch
      %18 = sbr.rel (0) target = $region13
    $region12: #{tpu_custom_call.1} parent=1 // pred_region
      _
    $region13: #{tpu_custom_call.1} parent=1 // pred_fallthru
      _
    // Predicated region
    $region14: #{tpu_custom_call.1} parent=1 // pred_check
      _
    $region15: #{tpu_custom_call.1} parent=1 // pred_check_branch
      %20 = sbr.rel (0) target = $region17
    $region16: #{tpu_custom_call.1} parent=1 // pred_region
      _
    $region17: #{tpu_custom_call.1} parent=1 // pred_fallthru
      _
    // Predicated region
    $region18: #{tpu_custom_call.1} parent=1 // pred_check
      _
    $region19: #{tpu_custom_call.1} parent=1 // pred_check_branch
      %22 = sbr.rel (0) target = $region21
    $region20: #{tpu_custom_call.1} parent=1 // pred_region
      _
    $region21: #{tpu_custom_call.1} parent=1 // pred_fallthru
      _
    // Predicated region
    $region22: #{tpu_custom_call.1} parent=1 // pred_check
      _
    $region23: #{tpu_custom_call.1} parent=1 // pred_check_branch
      %24 = sbr.rel (0) target = $region25
    $region24: #{tpu_custom_call.1} parent=1 // pred_region
      _
    $region25: #{tpu_custom_call.1} parent=1 // pred_fallthru
      _
    // Predicated region
    $region26: #{tpu_custom_call.1} parent=1 // pred_check
      _
    $region27: #{tpu_custom_call.1} parent=1 // pred_check_branch
      %26 = sbr.rel (0) target = $region29
    $region28: #{tpu_custom_call.1} parent=1 // pred_region
      _
    $region29: #{tpu_custom_call.1} parent=1 // pred_fallthru
      _
    %v27 = vld [vmem:[%s0] sm:$0xff]
    %v28 = vld [vmem:[%s1] sm:$0xff]
    %v29 = vld [vmem:[%s2] sm:$0x1]
    %v31 = vlaneseq
    %v32 = vshrl.u32 %v31, 7
    %v33 = vsub.s32 0, %v32
    %v34 = vrot.slane %v29, %v33
    %vm36 = vcmask 64512
    %v38 = vsel %vm36, %v27, 0
    %40 = vmatprep.subr.mxu0 0.0
    %41 = vmatpush1.msra.mxu0 0.0
    %42 = vmatprep.subr.mxu0 0.0
    %43 = vmatpush1.msra.mxu0 0.0
    %44 = vmatprep.subr.mxu0 0.0
    %45 = vmatpush1.msra.mxu0 0.0
    %46 = vmatprep.subr.mxu0 0.0
    %47 = vmatpush1.msra.mxu0 0.0
    %48 = vmatprep.subr.mxu0 0.0
    %49 = vmatpush1.msra.mxu0 0.0
    %50 = vmatprep.subr.mxu0 0.0
    %51 = vmatpush1.msra.mxu0 0.0
    %52 = vmatprep.subr.mxu0 0.0
    %53 = vmatpush1.msra.mxu0 0.0
    %54 = vmatprep.subr.mxu0 0.0
    %55 = vmatpush1.msra.mxu0 0.0
    %56 = vmatprep.subr.mxu0 0.0
    %57 = vmatpush1.msra.mxu0 0.0
    %58 = vmatprep.subr.mxu0 0.0
    %59 = vmatpush1.msra.mxu0 0.0
    %60 = vmatprep.subr.mxu0 0.0
    %61 = vmatpush1.msra.mxu0 0.0
    %62 = vmatprep.subr.mxu0 0.0
    %63 = vmatpush1.msra.mxu0 0.0
    %64 = vmatprep.subr.mxu0 0.0
    %65 = vmatpush1.msra.mxu0 0.0
    %66 = vmatprep.subr.mxu0 0.0
    %67 = vmatpush1.msra.mxu0 0.0
    %68 = vmatprep.subr.mxu0 0.0
    %69 = vmatpush1.msra.mxu0 0.0
    %70 = vmatprep.subr.mxu0 0.0
    %71 = vmatpush1.msra.mxu0 %v28
    %72 = vmatprep.subr.mxu0 0.0
    %73 = vmatpush2.msra.mxu0 0.0
    %74 = vmatprep.subr.mxu0 0.0
    %75 = vmatpush2.msra.mxu0 0.0
    %76 = vmatprep.subr.mxu0 0.0
    %77 = vmatpush2.msra.mxu0 0.0
    %78 = vmatprep.subr.mxu0 0.0
    %79 = vmatpush2.msra.mxu0 0.0
    %80 = vmatprep.subr.mxu0 0.0
    %81 = vmatpush2.msra.mxu0 0.0
    %82 = vmatprep.subr.mxu0 0.0
    %83 = vmatpush2.msra.mxu0 0.0
    %84 = vmatprep.subr.mxu0 0.0
    %85 = vmatpush2.msra.mxu0 0.0
    %86 = vmatprep.subr.mxu0 0.0
    %87 = vmatpush2.msra.mxu0 0.0
    %88 = vmatprep.subr.mxu0 0.0
    %89 = vmatpush2.msra.mxu0 0.0
    %90 = vmatprep.subr.mxu0 0.0
    %91 = vmatpush2.msra.mxu0 0.0
    %92 = vmatprep.subr.mxu0 0.0
    %93 = vmatpush2.msra.mxu0 0.0
    %94 = vmatprep.subr.mxu0 0.0
    %95 = vmatpush2.msra.mxu0 0.0
    %96 = vmatprep.subr.mxu0 0.0
    %97 = vmatpush2.msra.mxu0 0.0
    %98 = vmatprep.subr.mxu0 0.0
    %99 = vmatpush2.msra.mxu0 0.0
    %100 = vmatprep.subr.mxu0 0.0
    %101 = vmatpush2.msra.mxu0 0.0
    %102 = vmatprep.subr.mxu0 0.0
    %103 = vmatpush2.msra.mxu0 0.0
    %104 = vmatprep.mubr.f32.mxu0 0.0
    %105 = vmatmul.mubr.f32.gmra.mxu0 %v38
    %v106 = vpop.f32.mrf.mxu0
    %v107 = vadd.f32 %v34, %v106
    %v108 = vpop.f32.mrf.mxu0
    %109 = vdwg.mxu0
    %v110 = vmax.f32 %v107, 0.0
    %v111 = vld [vmem:[%s3] sm:$0xff]
    %v112 = vld [vmem:[%s3 + $0x8] sm:$0xff]
    %v113 = vld [vmem:[%s3 + $0x10] sm:$0xff]
    %v114 = vld [vmem:[%s3 + $0x18] sm:$0xff]
    %v115 = vld [vmem:[%s4] sm:$0x1]
    %v117 = vlaneseq
    %v118 = vshrl.u32 %v117, 7
    %v119 = vsub.s32 0, %v118
    %v120 = vrot.slane %v115, %v119
    %vm122 = vcmask 261120
    %v124 = vsel %vm122, %v110, 0
    %126 = vmatprep.subr.mxu0 0.0
    %127 = vmatpush1.msra.mxu0 0.0
    %128 = vmatprep.subr.mxu0 0.0
    %129 = vmatpush1.msra.mxu0 0.0
    %130 = vmatprep.subr.mxu0 0.0
    %131 = vmatpush1.msra.mxu0 0.0
    %132 = vmatprep.subr.mxu0 0.0
    %133 = vmatpush1.msra.mxu0 0.0
    %134 = vmatprep.subr.mxu0 0.0
    %135 = vmatpush1.msra.mxu0 0.0
    %136 = vmatprep.subr.mxu0 0.0
    %137 = vmatpush1.msra.mxu0 0.0
    %138 = vmatprep.subr.mxu0 0.0
    %139 = vmatpush1.msra.mxu0 0.0
    %140 = vmatprep.subr.mxu0 0.0
    %141 = vmatpush1.msra.mxu0 0.0
    %142 = vmatprep.subr.mxu0 0.0
    %143 = vmatpush1.msra.mxu0 0.0
    %144 = vmatprep.subr.mxu0 0.0
    %145 = vmatpush1.msra.mxu0 0.0
    %146 = vmatprep.subr.mxu0 0.0
    %147 = vmatpush1.msra.mxu0 0.0
    %148 = vmatprep.subr.mxu0 0.0
    %149 = vmatpush1.msra.mxu0 0.0
    %150 = vmatprep.subr.mxu0 0.0
    %151 = vmatpush1.msra.mxu0 %v114
    %152 = vmatprep.subr.mxu0 0.0
    %153 = vmatpush1.msra.mxu0 %v113
    %154 = vmatprep.subr.mxu0 0.0
    %155 = vmatpush1.msra.mxu0 %v112
    %156 = vmatprep.subr.mxu0 0.0
    %157 = vmatpush1.msra.mxu0 %v111
    %158 = vmatprep.subr.mxu0 0.0
    %159 = vmatpush2.msra.mxu0 0.0
    %160 = vmatprep.subr.mxu0 0.0
    %161 = vmatpush2.msra.mxu0 0.0
    %162 = vmatprep.subr.mxu0 0.0
    %163 = vmatpush2.msra.mxu0 0.0
    %164 = vmatprep.subr.mxu0 0.0
    %165 = vmatpush2.msra.mxu0 0.0
    %166 = vmatprep.subr.mxu0 0.0
    %167 = vmatpush2.msra.mxu0 0.0
    %168 = vmatprep.subr.mxu0 0.0
    %169 = vmatpush2.msra.mxu0 0.0
    %170 = vmatprep.subr.mxu0 0.0
    %171 = vmatpush2.msra.mxu0 0.0
    %172 = vmatprep.subr.mxu0 0.0
    %173 = vmatpush2.msra.mxu0 0.0
    %174 = vmatprep.subr.mxu0 0.0
    %175 = vmatpush2.msra.mxu0 0.0
    %176 = vmatprep.subr.mxu0 0.0
    %177 = vmatpush2.msra.mxu0 0.0
    %178 = vmatprep.subr.mxu0 0.0
    %179 = vmatpush2.msra.mxu0 0.0
    %180 = vmatprep.subr.mxu0 0.0
    %181 = vmatpush2.msra.mxu0 0.0
    %182 = vmatprep.subr.mxu0 0.0
    %183 = vmatpush2.msra.mxu0 0.0
    %184 = vmatprep.subr.mxu0 0.0
    %185 = vmatpush2.msra.mxu0 0.0
    %186 = vmatprep.subr.mxu0 0.0
    %187 = vmatpush2.msra.mxu0 0.0
    %188 = vmatprep.subr.mxu0 0.0
    %189 = vmatpush2.msra.mxu0 0.0
    %190 = vmatprep.mubr.f32.mxu0 0.0
    %191 = vmatmul.mubr.f32.gmra.mxu0 %v124
    %v192 = vpop.f32.mrf.mxu0
    %v193 = vadd.f32 %v120, %v192
    %v194 = vpop.f32.mrf.mxu0
    %195 = vdwg.mxu0
    %v196 = vmax.f32 %v193, 0.0
    %v197 = vld [vmem:[%s5] sm:$0xff]
    %v198 = vld [vmem:[%s5 + $0x8] sm:$0xff]
    %v199 = vld [vmem:[%s5 + $0x10] sm:$0xff]
    %v200 = vld [vmem:[%s5 + $0x18] sm:$0xff]
    %v201 = vld [vmem:[%s6] sm:$0x1]
    %v203 = vlaneseq
    %v204 = vshrl.u32 %v203, 7
    %v205 = vsub.s32 0, %v204
    %v206 = vrot.slane %v201, %v205
    %v209 = vsel %vm122, %v196, 0
    %211 = vmatprep.subr.mxu0 0.0
    %212 = vmatpush1.msra.mxu0 0.0
    %213 = vmatprep.subr.mxu0 0.0
    %214 = vmatpush1.msra.mxu0 0.0
    %215 = vmatprep.subr.mxu0 0.0
    %216 = vmatpush1.msra.mxu0 0.0
    %217 = vmatprep.subr.mxu0 0.0
    %218 = vmatpush1.msra.mxu0 0.0
    %219 = vmatprep.subr.mxu0 0.0
    %220 = vmatpush1.msra.mxu0 0.0
    %221 = vmatprep.subr.mxu0 0.0
    %222 = vmatpush1.msra.mxu0 0.0
    %223 = vmatprep.subr.mxu0 0.0
    %224 = vmatpush1.msra.mxu0 0.0
    %225 = vmatprep.subr.mxu0 0.0
    %226 = vmatpush1.msra.mxu0 0.0
    %227 = vmatprep.subr.mxu0 0.0
    %228 = vmatpush1.msra.mxu0 0.0
    %229 = vmatprep.subr.mxu0 0.0
    %230 = vmatpush1.msra.mxu0 0.0
    %231 = vmatprep.subr.mxu0 0.0
    %232 = vmatpush1.msra.mxu0 0.0
    %233 = vmatprep.subr.mxu0 0.0
    %234 = vmatpush1.msra.mxu0 0.0
    %235 = vmatprep.subr.mxu0 0.0
    %236 = vmatpush1.msra.mxu0 %v200
    %237 = vmatprep.subr.mxu0 0.0
    %238 = vmatpush1.msra.mxu0 %v199
    %239 = vmatprep.subr.mxu0 0.0
    %240 = vmatpush1.msra.mxu0 %v198
    %241 = vmatprep.subr.mxu0 0.0
    %242 = vmatpush1.msra.mxu0 %v197
    %243 = vmatprep.subr.mxu0 0.0
    %244 = vmatpush2.msra.mxu0 0.0
    %245 = vmatprep.subr.mxu0 0.0
    %246 = vmatpush2.msra.mxu0 0.0
    %247 = vmatprep.subr.mxu0 0.0
    %248 = vmatpush2.msra.mxu0 0.0
    %249 = vmatprep.subr.mxu0 0.0
    %250 = vmatpush2.msra.mxu0 0.0
    %251 = vmatprep.subr.mxu0 0.0
    %252 = vmatpush2.msra.mxu0 0.0
    %253 = vmatprep.subr.mxu0 0.0
    %254 = vmatpush2.msra.mxu0 0.0
    %255 = vmatprep.subr.mxu0 0.0
    %256 = vmatpush2.msra.mxu0 0.0
    %257 = vmatprep.subr.mxu0 0.0
    %258 = vmatpush2.msra.mxu0 0.0
    %259 = vmatprep.subr.mxu0 0.0
    %260 = vmatpush2.msra.mxu0 0.0
    %261 = vmatprep.subr.mxu0 0.0
    %262 = vmatpush2.msra.mxu0 0.0
    %263 = vmatprep.subr.mxu0 0.0
    %264 = vmatpush2.msra.mxu0 0.0
    %265 = vmatprep.subr.mxu0 0.0
    %266 = vmatpush2.msra.mxu0 0.0
    %267 = vmatprep.subr.mxu0 0.0
    %268 = vmatpush2.msra.mxu0 0.0
    %269 = vmatprep.subr.mxu0 0.0
    %270 = vmatpush2.msra.mxu0 0.0
    %271 = vmatprep.subr.mxu0 0.0
    %272 = vmatpush2.msra.mxu0 0.0
    %273 = vmatprep.subr.mxu0 0.0
    %274 = vmatpush2.msra.mxu0 0.0
    %275 = vmatprep.mubr.f32.mxu0 0.0
    %276 = vmatmul.mubr.f32.gmra.mxu0 %v209
    %v277 = vpop.f32.mrf.mxu0
    %v278 = vadd.f32 %v206, %v277
    %v279 = vpop.f32.mrf.mxu0
    %280 = vdwg.mxu0
    %vm281 = vcmask 80896
    %282 = vst.msk [vmem:[#allocation2] sm:$0xff] %vm281, %v278
    // Predicated region
    $region30: #{tpu_custom_call.1} parent=1 // pred_check
      _
    $region31: #{tpu_custom_call.1} parent=1 // pred_check_branch
      %284 = sbr.rel (0) target = $region33
    $region32: #{tpu_custom_call.1} parent=1 // pred_region
      %s286 = ssub.s32 128, 128
      %287 = vsyncadd [#allocation3], %s286
      %s289 = sshll.u32 [#allocation2], 4
      %s290 = int_to_ptr.vmem [resolvable:$true] %s289
      %292 = dma.vmem_to_hbm [thread:$0]  %s290, 128, %s7, [#allocation3]
    $region33: #{tpu_custom_call.1} parent=1 // pred_fallthru
      _
    // Predicated region
    $region34: #{tpu_custom_call.1} parent=1 // pred_check
      _
    $region35: #{tpu_custom_call.1} parent=1 // pred_check_branch
      %294 = sbr.rel (0) target = $region37
    $region36: #{tpu_custom_call.1} parent=1 // pred_region
      %295 = dma.done [#allocation3], 128
    $region37: #{tpu_custom_call.1} parent=1 // pred_fallthru
      _
    %296 = vsyncpa [#allocation3], 1

</llo_original>
